<compile_context>
chip_gen: v6e
topology: v6e:2x2x1
jax: 0.10.0
libtpu: 0.0.40
codegen_flags: <defaults>
</compile_context>

<pallas_src>
import jax
import jax.numpy as jnp
from jax.experimental import pallas as pl
from jax.experimental.pallas import tpu as pltpu


def _round_up(x, m):
    return ((x + m - 1) // m) * m


def _mlp_kernel(x_ref, w1_ref, b1_ref, w2_ref, b2_ref, z0_ref):
    # x : (F_in, tb) f32      w1: (256, F_in) bf16    b1: (256, 1) f32
    # w2: (H8, 256) bf16      b2: (H8, 1)    f32      z0: (H8, tb) f32
    x = x_ref[...].astype(w1_ref.dtype)                              # VPU cast
    h = jnp.dot(w1_ref[...], x, preferred_element_type=jnp.float32)  # (256,tb)
    h = jnp.maximum(h + b1_ref[...], 0.0)                            # fp32 VPU
    z = jnp.dot(w2_ref[...], h.astype(w2_ref.dtype),
                preferred_element_type=jnp.float32) + b2_ref[...]    # (H8,tb)
    z0_ref[...] = z


def prepare_params(params):
    """One-time preprocessing of nn.Linear params for the Pallas kernel.

    PyTorch layouts: linear1.weight (256, F_in), linear1.bias (256,),
    linear2.weight (H, 256), linear2.bias (H,). The (out, in) storage is
    already the orientation the transposed kernel consumes — no per-call work.
    """
    w1 = params["linear1_weight"]
    b1 = params["linear1_bias"]
    w2 = params["linear2_weight"]
    b2 = params["linear2_bias"]
    H = w2.shape[0]
    H8 = _round_up(H, 8)                      # sublane-align output rows
    if H8 != H:
        w2 = jnp.pad(w2, ((0, H8 - H), (0, 0)))
        b2 = jnp.pad(b2, ((0, H8 - H),))
    return {
        "w1t": w1.astype(jnp.bfloat16),                      # (256, F_in)
        "b1": b1.reshape(-1, 1).astype(jnp.float32),         # (256, 1)
        "w2t": w2.astype(jnp.bfloat16),                      # (H8, 256)
        "b2": b2.reshape(-1, 1).astype(jnp.float32),         # (H8, 1)
        "hidden_channels": H,
    }


def initial_value_mlp(static, prepared, *, block_b=128):
    """z0 = relu(static @ W1^T + b1) @ W2^T + b2 via a batch-on-lanes kernel.

    `static` is (B, F_in) f32; returns (B, H) f32.
    """
    B, F_in = static.shape
    w1t, b1 = prepared["w1t"], prepared["b1"]
    w2t, b2 = prepared["w2t"], prepared["b2"]
    H = prepared["hidden_channels"]
    H8 = w2t.shape[0]
    K = w1t.shape[0]                                         # 256

    # Batch tile: lane-aligned (multiple of 128), default 128 so B > 128 gives
    # >= 2 grid steps (v7x megacore) and the fp32 intermediate stays small.
    tb = max(128, _round_up(min(block_b, B), 128))
    B_pad = _round_up(B, tb)

    x = static if static.dtype == jnp.float32 else static.astype(jnp.float32)
    xt = x.T                                                  # (F_in, B) tiny
    if B_pad != B:
        xt = jnp.pad(xt, ((0, 0), (0, B_pad - B)))

    grid = (B_pad // tb,)

    flops = 2 * B_pad * (F_in * K + K * H8)
    bytes_accessed = (
        xt.size * xt.dtype.itemsize
        + w1t.size * w1t.dtype.itemsize
        + b1.size * b1.dtype.itemsize
        + w2t.size * w2t.dtype.itemsize
        + b2.size * b2.dtype.itemsize
        + B_pad * H8 * 4
    )

    z0t = pl.pallas_call(
        _mlp_kernel,
        out_shape=jax.ShapeDtypeStruct((H8, B_pad), jnp.float32),
        grid=grid,
        in_specs=[
            pl.BlockSpec((F_in, tb), lambda i: (0, i)),      # streamed static^T
            pl.BlockSpec(w1t.shape, lambda i: (0, 0)),       # VMEM resident
            pl.BlockSpec(b1.shape, lambda i: (0, 0)),        # VMEM resident
            pl.BlockSpec(w2t.shape, lambda i: (0, 0)),       # VMEM resident
            pl.BlockSpec(b2.shape, lambda i: (0, 0)),        # VMEM resident
        ],
        out_specs=pl.BlockSpec((H8, tb), lambda i: (0, i)),  # lane-dense store
        compiler_params=pltpu.CompilerParams(
            dimension_semantics=("parallel",)),
        cost_estimate=pl.CostEstimate(
            flops=flops, transcendentals=0, bytes_accessed=bytes_accessed),
    )(xt, w1t, b1, w2t, b2)

    if H8 != H or B_pad != B:
        z0t = z0t[:H, :B]
    return z0t.T                                              # (B, H)


def initial_value_network_forward(times, coeffs, final_index, prepared):
    """JAX/Pallas equivalent of InitialValueNetwork.forward.

    `coeffs` is a tuple whose last element is `static`, mirroring
    `*coeffs, static = coeffs` in the PyTorch module.
    """
    *_cde_coeffs, static = coeffs
    z0 = initial_value_mlp(static, prepared)
    # TODO(synk): self.model (the downstream Neural CDE/SDE solver) is an
    # external module not defined by this spec; return z0 (the initial latent
    # state) instead of calling it.
    return z0


def init_params(key, intensity=True, hidden_channels=32):
    in_features = 7 if intensity else 5
    k1, k2, k3, k4 = jax.random.split(key, 4)
    # PyTorch nn.Linear default init: U(-1/sqrt(fan_in), 1/sqrt(fan_in))
    bound1 = 1.0 / jnp.sqrt(float(in_features))
    bound2 = 1.0 / jnp.sqrt(256.0)
    params = {
        "linear1_weight": jax.random.uniform(
            k1, (256, in_features), jnp.float32, -bound1, bound1),
        "linear1_bias": jax.random.uniform(
            k2, (256,), jnp.float32, -bound1, bound1),
        "linear2_weight": jax.random.uniform(
            k3, (hidden_channels, 256), jnp.float32, -bound2, bound2),
        "linear2_bias": jax.random.uniform(
            k4, (hidden_channels,), jnp.float32, -bound2, bound2),
    }
    return params, in_features


if __name__ == "__main__":
    intensity = True
    hidden_channels = 32
    batch = 8
    seq = 8

    params, in_features = init_params(jax.random.PRNGKey(0), intensity,
                                      hidden_channels)
    prepared = prepare_params(params)          # one-time, hoisted out of calls

    kt, kc1, kc2, kc3, ks = jax.random.split(jax.random.PRNGKey(0), 5)
    times = jnp.linspace(0.0, 1.0, seq, dtype=jnp.float32)
    # cubic-spline coefficient placeholders + trailing `static` tensor
    c1 = jax.random.normal(kc1, (batch, seq - 1, in_features), jnp.float32)
    c2 = jax.random.normal(kc2, (batch, seq - 1, in_features), jnp.float32)
    c3 = jax.random.normal(kc3, (batch, seq - 1, in_features), jnp.float32)
    static = jax.random.normal(ks, (batch, in_features), jnp.float32)
    coeffs = (c1, c2, c3, static)
    final_index = jnp.full((batch,), seq - 1, dtype=jnp.int32)

    z0 = initial_value_network_forward(times, coeffs, final_index, prepared)
    z0 = jax.block_until_ready(z0)
    assert z0.shape == (batch, hidden_channels)

    # Reference in plain JAX using the same bf16-weight / fp32-accumulate path.
    w1 = params["linear1_weight"]
    b1 = params["linear1_bias"]
    w2 = params["linear2_weight"]
    b2 = params["linear2_bias"]
    h_ref = jnp.dot(static.astype(jnp.bfloat16), w1.T.astype(jnp.bfloat16),
                    preferred_element_type=jnp.float32) + b1
    h_ref = jnp.maximum(h_ref, 0.0)
    ref = jnp.dot(h_ref.astype(jnp.bfloat16), w2.T.astype(jnp.bfloat16),
                  preferred_element_type=jnp.float32) + b2
    assert jnp.allclose(z0, ref, atol=1e-3, rtol=1e-3)

    # Sanity vs. full-fp32 math (loose, bf16-weight rounding only).
    ref_f32 = jnp.maximum(static @ w1.T + b1, 0.0) @ w2.T + b2
    assert jnp.allclose(z0, ref_f32, atol=5e-2, rtol=5e-2)

    print("KERNEL_OK")
</pallas_src>

<mosaic_0001>
module attributes {stable_mosaic.version = 11 : i64} {
  func.func @_mlp_kernel(%arg0: i32, %arg1: memref<7x128xf32, #tpu.memory_space<vmem>>, %arg2: memref<256x7xbf16, #tpu.memory_space<vmem>>, %arg3: memref<256x1xf32, #tpu.memory_space<vmem>>, %arg4: memref<32x256xbf16, #tpu.memory_space<vmem>>, %arg5: memref<32x1xf32, #tpu.memory_space<vmem>>, %arg6: memref<32x128xf32, #tpu.memory_space<vmem>>) attributes {dimension_semantics = [#tpu.dimension_semantics<parallel>], iteration_bounds = array<i64: 1>, scalar_prefetch = 0 : i64, scratch_operands = 0 : i64, tpu.core_type = #tpu.core_type<tc>, window_params = [{transform_indices = @transform_0, window_bounds = array<i64: 7, 128>}, {pipeline_mode = #tpu.pipeline_mode<synchronous>, transform_indices = @transform_1, window_bounds = array<i64: 256, 7>}, {pipeline_mode = #tpu.pipeline_mode<synchronous>, transform_indices = @transform_2, window_bounds = array<i64: 256, 1>}, {pipeline_mode = #tpu.pipeline_mode<synchronous>, transform_indices = @transform_3, window_bounds = array<i64: 32, 256>}, {pipeline_mode = #tpu.pipeline_mode<synchronous>, transform_indices = @transform_4, window_bounds = array<i64: 32, 1>}, {transform_indices = @transform_5, window_bounds = array<i64: 32, 128>}]} {
    %c0 = arith.constant 0 : index
    %c0_0 = arith.constant 0 : index
    %0 = vector.load %arg1[%c0, %c0_0] : memref<7x128xf32, #tpu.memory_space<vmem>>, vector<7x128xf32>
    %1 = arith.truncf %0 : vector<7x128xf32> to vector<7x128xbf16>
    %c0_1 = arith.constant 0 : index
    %c0_2 = arith.constant 0 : index
    %2 = vector.load %arg2[%c0_1, %c0_2] : memref<256x7xbf16, #tpu.memory_space<vmem>>, vector<256x7xbf16>
    %cst = arith.constant dense<0.000000e+00> : vector<256x128xf32>
    %3 = tpu.matmul %2, %1, %cst {dimension_numbers = #tpu.dot_dimension_numbers<[1], [0], [0], [1], [0, 0, 1, 1], [], []>} : vector<256x7xbf16>, vector<7x128xbf16>, vector<256x128xf32> -> vector<256x128xf32>
    %c0_3 = arith.constant 0 : index
    %c0_4 = arith.constant 0 : index
    %4 = vector.load %arg3[%c0_3, %c0_4] : memref<256x1xf32, #tpu.memory_space<vmem>>, vector<256x1xf32>
    %5 = vector.broadcast %4 : vector<256x1xf32> to vector<256x128xf32>
    %6 = arith.addf %3, %5 : vector<256x128xf32>
    %cst_5 = arith.constant 0.000000e+00 : f32
    %7 = vector.broadcast %cst_5 : f32 to vector<256x128xf32>
    %8 = arith.maximumf %6, %7 : vector<256x128xf32>
    %c0_6 = arith.constant 0 : index
    %c0_7 = arith.constant 0 : index
    %9 = vector.load %arg4[%c0_6, %c0_7] : memref<32x256xbf16, #tpu.memory_space<vmem>>, vector<32x256xbf16>
    %10 = arith.truncf %8 : vector<256x128xf32> to vector<256x128xbf16>
    %cst_8 = arith.constant dense<0.000000e+00> : vector<32x128xf32>
    %11 = tpu.matmul %9, %10, %cst_8 {dimension_numbers = #tpu.dot_dimension_numbers<[1], [0], [0], [1], [0, 0, 1, 1], [], []>} : vector<32x256xbf16>, vector<256x128xbf16>, vector<32x128xf32> -> vector<32x128xf32>
    %c0_9 = arith.constant 0 : index
    %c0_10 = arith.constant 0 : index
    %12 = vector.load %arg5[%c0_9, %c0_10] : memref<32x1xf32, #tpu.memory_space<vmem>>, vector<32x1xf32>
    %13 = vector.broadcast %12 : vector<32x1xf32> to vector<32x128xf32>
    %14 = arith.addf %11, %13 : vector<32x128xf32>
    %c0_11 = arith.constant 0 : index
    %c0_12 = arith.constant 0 : index
    %15 = vector.load %arg6[%c0_11, %c0_12] : memref<32x128xf32, #tpu.memory_space<vmem>>, vector<32x128xf32>
    tpu.vector_store %arg6[%c0_11, %c0_12], %14 {strides = array<i32>} : memref<32x128xf32, #tpu.memory_space<vmem>>, vector<32x128xf32>,
    return
  }
  func.func @transform_0(%arg0: i32) -> (i32, i32) {
    %c0_i32 = arith.constant 0 : i32
    %c0_i32_0 = arith.constant 0 : i32
    return %c0_i32, %arg0 : i32, i32
  }
  func.func @transform_1(%arg0: i32) -> (i32, i32) {
    %c0_i32 = arith.constant 0 : i32
    %c0_i32_0 = arith.constant 0 : i32
    %c0_i32_1 = arith.constant 0 : i32
    return %c0_i32, %c0_i32_0 : i32, i32
  }
  func.func @transform_2(%arg0: i32) -> (i32, i32) {
    %c0_i32 = arith.constant 0 : i32
    %c0_i32_0 = arith.constant 0 : i32
    %c0_i32_1 = arith.constant 0 : i32
    return %c0_i32, %c0_i32_0 : i32, i32
  }
  func.func @transform_3(%arg0: i32) -> (i32, i32) {
    %c0_i32 = arith.constant 0 : i32
    %c0_i32_0 = arith.constant 0 : i32
    %c0_i32_1 = arith.constant 0 : i32
    return %c0_i32, %c0_i32_0 : i32, i32
  }
  func.func @transform_4(%arg0: i32) -> (i32, i32) {
    %c0_i32 = arith.constant 0 : i32
    %c0_i32_0 = arith.constant 0 : i32
    %c0_i32_1 = arith.constant 0 : i32
    return %c0_i32, %c0_i32_0 : i32, i32
  }
  func.func @transform_5(%arg0: i32) -> (i32, i32) {
    %c0_i32 = arith.constant 0 : i32
    %c0_i32_0 = arith.constant 0 : i32
    return %c0_i32, %arg0 : i32, i32
  }
}

</mosaic_0001>

<llo_original>
// kernel: tpu_custom_call.1
$region0: #{tpu_custom_call.1}
  #allocation0 [shape = 'u32[]', space=smem, size = 0x4, offset = 0x4, fixed_abs, tag = 'smem constant byte address 0x4 - core index']
  #allocation1 [shape = 'u32[144,128]{1,0:T(1,128)}', space=vmem, size = 0x12000, scoped, tag = 'internal scratch']
  %s0 = inlined_call_operand.vmem [shape: f32[7,128], index: 0, kind: input, shape index: {}]
  %s1 = inlined_call_operand.vmem [shape: bf16[256,7], index: 1, kind: input, shape index: {}]
  %s2 = inlined_call_operand.vmem [shape: f32[256,1], index: 2, kind: input, shape index: {}]
  %s3 = inlined_call_operand.vmem [shape: bf16[32,256], index: 3, kind: input, shape index: {}]
  %s4 = inlined_call_operand.vmem [shape: f32[32,1], index: 4, kind: input, shape index: {}]
  %s5 = inlined_call_operand.hbm [shape: f32[32,128], index: 5, kind: output, shape index: {}]
  %s6 = sld [smem:[#allocation0]]
  $region30: #{tpu_custom_call.1} parent=0
    _
  %s8 = ssub.s32 1, %s6
  %s9 = scalar_select 0, %s8, %s6
  $region1: #{tpu_custom_call.1} parent=0
    #allocation2 [shape = 'u8[16384]{0}', space=vmem, size = 0x4000, scoped, tag = 'output window, operand 0, single buffered']
    #allocation3 [shape = 's32[1]{0}', space=sflag, size = 0x4, scoped, tag = 'scoped memory for tpu_custom_call.1']
    %10 = vsyncpa [#allocation3], 0
    // Predicated region
    $region2: #{tpu_custom_call.1} parent=1 // pred_check
      _
    $region3: #{tpu_custom_call.1} parent=1 // pred_check_branch
      %12 = sbr.rel (0) target = $region5
    $region4: #{tpu_custom_call.1} parent=1 // pred_region
      _
    $region5: #{tpu_custom_call.1} parent=1 // pred_fallthru
      _
    // Predicated region
    $region6: #{tpu_custom_call.1} parent=1 // pred_check
      _
    $region7: #{tpu_custom_call.1} parent=1 // pred_check_branch
      %14 = sbr.rel (0) target = $region9
    $region8: #{tpu_custom_call.1} parent=1 // pred_region
      _
    $region9: #{tpu_custom_call.1} parent=1 // pred_fallthru
      _
    // Predicated region
    $region10: #{tpu_custom_call.1} parent=1 // pred_check
      _
    $region11: #{tpu_custom_call.1} parent=1 // pred_check_branch
      %16 = sbr.rel (0) target = $region13
    $region12: #{tpu_custom_call.1} parent=1 // pred_region
      _
    $region13: #{tpu_custom_call.1} parent=1 // pred_fallthru
      _
    // Predicated region
    $region14: #{tpu_custom_call.1} parent=1 // pred_check
      _
    $region15: #{tpu_custom_call.1} parent=1 // pred_check_branch
      %18 = sbr.rel (0) target = $region17
    $region16: #{tpu_custom_call.1} parent=1 // pred_region
      _
    $region17: #{tpu_custom_call.1} parent=1 // pred_fallthru
      _
    // Predicated region
    $region18: #{tpu_custom_call.1} parent=1 // pred_check
      _
    $region19: #{tpu_custom_call.1} parent=1 // pred_check_branch
      %20 = sbr.rel (0) target = $region21
    $region20: #{tpu_custom_call.1} parent=1 // pred_region
      _
    $region21: #{tpu_custom_call.1} parent=1 // pred_fallthru
      _
    %v22 = vld [vmem:[%s0] sm:$0x7f]
    %v23 = vpack.c.bf16 %v22, %v22
    %v24 = vld [vmem:[%s1] sm:$0xf]
    %v25 = vld [vmem:[%s1 + $0x4] sm:$0xf]
    %v26 = vld [vmem:[%s1 + $0x8] sm:$0xf]
    %v27 = vld [vmem:[%s1 + $0xc] sm:$0xf]
    %v28 = vld [vmem:[%s1 + $0x10] sm:$0xf]
    %v29 = vld [vmem:[%s1 + $0x14] sm:$0xf]
    %v30 = vld [vmem:[%s1 + $0x18] sm:$0xf]
    %v31 = vld [vmem:[%s1 + $0x1c] sm:$0xf]
    %v32 = vld [vmem:[%s1 + $0x20] sm:$0xf]
    %v33 = vld [vmem:[%s1 + $0x24] sm:$0xf]
    %v34 = vld [vmem:[%s1 + $0x28] sm:$0xf]
    %v35 = vld [vmem:[%s1 + $0x2c] sm:$0xf]
    %v36 = vld [vmem:[%s1 + $0x30] sm:$0xf]
    %v37 = vld [vmem:[%s1 + $0x34] sm:$0xf]
    %v38 = vld [vmem:[%s1 + $0x38] sm:$0xf]
    %v39 = vld [vmem:[%s1 + $0x3c] sm:$0xf]
    %v40 = vld [vmem:[%s1 + $0x40] sm:$0xf]
    %v41 = vld [vmem:[%s1 + $0x44] sm:$0xf]
    %v42 = vld [vmem:[%s1 + $0x48] sm:$0xf]
    %v43 = vld [vmem:[%s1 + $0x4c] sm:$0xf]
    %v44 = vld [vmem:[%s1 + $0x50] sm:$0xf]
    %v45 = vld [vmem:[%s1 + $0x54] sm:$0xf]
    %v46 = vld [vmem:[%s1 + $0x58] sm:$0xf]
    %v47 = vld [vmem:[%s1 + $0x5c] sm:$0xf]
    %v48 = vld [vmem:[%s1 + $0x60] sm:$0xf]
    %v49 = vld [vmem:[%s1 + $0x64] sm:$0xf]
    %v50 = vld [vmem:[%s1 + $0x68] sm:$0xf]
    %v51 = vld [vmem:[%s1 + $0x6c] sm:$0xf]
    %v52 = vld [vmem:[%s1 + $0x70] sm:$0xf]
    %v53 = vld [vmem:[%s1 + $0x74] sm:$0xf]
    %v54 = vld [vmem:[%s1 + $0x78] sm:$0xf]
    %v55 = vld [vmem:[%s1 + $0x7c] sm:$0xf]
    %v56 = vld [vmem:[%s2] sm:$0xff]
    %v57 = vld [vmem:[%s2 + $0x8] sm:$0xff]
    %v58 = vld [vmem:[%s2 + $0x10] sm:$0xff]
    %v59 = vld [vmem:[%s2 + $0x18] sm:$0xff]
    %v60 = vld [vmem:[%s2 + $0x20] sm:$0xff]
    %v61 = vld [vmem:[%s2 + $0x28] sm:$0xff]
    %v62 = vld [vmem:[%s2 + $0x30] sm:$0xff]
    %v63 = vld [vmem:[%s2 + $0x38] sm:$0xff]
    %v64 = vld [vmem:[%s2 + $0x40] sm:$0xff]
    %v65 = vld [vmem:[%s2 + $0x48] sm:$0xff]
    %v66 = vld [vmem:[%s2 + $0x50] sm:$0xff]
    %v67 = vld [vmem:[%s2 + $0x58] sm:$0xff]
    %v68 = vld [vmem:[%s2 + $0x60] sm:$0xff]
    %v69 = vld [vmem:[%s2 + $0x68] sm:$0xff]
    %v70 = vld [vmem:[%s2 + $0x70] sm:$0xff]
    %v71 = vld [vmem:[%s2 + $0x78] sm:$0xff]
    %v72 = vld [vmem:[%s2 + $0x80] sm:$0xff]
    %v73 = vld [vmem:[%s2 + $0x88] sm:$0xff]
    %v74 = vld [vmem:[%s2 + $0x90] sm:$0xff]
    %v75 = vld [vmem:[%s2 + $0x98] sm:$0xff]
    %v76 = vld [vmem:[%s2 + $0xa0] sm:$0xff]
    %v77 = vld [vmem:[%s2 + $0xa8] sm:$0xff]
    %v78 = vld [vmem:[%s2 + $0xb0] sm:$0xff]
    %v79 = vld [vmem:[%s2 + $0xb8] sm:$0xff]
    %v80 = vld [vmem:[%s2 + $0xc0] sm:$0xff]
    %v81 = vld [vmem:[%s2 + $0xc8] sm:$0xff]
    %v82 = vld [vmem:[%s2 + $0xd0] sm:$0xff]
    %v83 = vld [vmem:[%s2 + $0xd8] sm:$0xff]
    %v84 = vld [vmem:[%s2 + $0xe0] sm:$0xff]
    %v85 = vld [vmem:[%s2 + $0xe8] sm:$0xff]
    %v86 = vld [vmem:[%s2 + $0xf0] sm:$0xff]
    %v87 = vld [vmem:[%s2 + $0xf8] sm:$0xff]
    %89 = vset.pattern.permute.xlu0 0
    %90 = vperm.xlu0 %89, %v56
    %v91 = vpop.permute.xlu0 %90
    %94 = vset.pattern.permute.xlu0 0
    %95 = vperm.xlu0 %94, %v57
    %v96 = vpop.permute.xlu0 %95
    %99 = vset.pattern.permute.xlu0 0
    %100 = vperm.xlu0 %99, %v58
    %v101 = vpop.permute.xlu0 %100
    %104 = vset.pattern.permute.xlu0 0
    %105 = vperm.xlu0 %104, %v59
    %v106 = vpop.permute.xlu0 %105
    %109 = vset.pattern.permute.xlu0 0
    %110 = vperm.xlu0 %109, %v60
    %v111 = vpop.permute.xlu0 %110
    %114 = vset.pattern.permute.xlu0 0
    %115 = vperm.xlu0 %114, %v61
    %v116 = vpop.permute.xlu0 %115
    %119 = vset.pattern.permute.xlu0 0
    %120 = vperm.xlu0 %119, %v62
    %v121 = vpop.permute.xlu0 %120
    %124 = vset.pattern.permute.xlu0 0
    %125 = vperm.xlu0 %124, %v63
    %v126 = vpop.permute.xlu0 %125
    %129 = vset.pattern.permute.xlu0 0
    %130 = vperm.xlu0 %129, %v64
    %v131 = vpop.permute.xlu0 %130
    %134 = vset.pattern.permute.xlu0 0
    %135 = vperm.xlu0 %134, %v65
    %v136 = vpop.permute.xlu0 %135
    %139 = vset.pattern.permute.xlu0 0
    %140 = vperm.xlu0 %139, %v66
    %v141 = vpop.permute.xlu0 %140
    %144 = vset.pattern.permute.xlu0 0
    %145 = vperm.xlu0 %144, %v67
    %v146 = vpop.permute.xlu0 %145
    %149 = vset.pattern.permute.xlu0 0
    %150 = vperm.xlu0 %149, %v68
    %v151 = vpop.permute.xlu0 %150
    %154 = vset.pattern.permute.xlu0 0
    %155 = vperm.xlu0 %154, %v69
    %v156 = vpop.permute.xlu0 %155
    %159 = vset.pattern.permute.xlu0 0
    %160 = vperm.xlu0 %159, %v70
    %v161 = vpop.permute.xlu0 %160
    %164 = vset.pattern.permute.xlu0 0
    %165 = vperm.xlu0 %164, %v71
    %v166 = vpop.permute.xlu0 %165
    %169 = vset.pattern.permute.xlu0 0
    %170 = vperm.xlu0 %169, %v72
    %v171 = vpop.permute.xlu0 %170
    %174 = vset.pattern.permute.xlu0 0
    %175 = vperm.xlu0 %174, %v73
    %v176 = vpop.permute.xlu0 %175
    %179 = vset.pattern.permute.xlu0 0
    %180 = vperm.xlu0 %179, %v74
    %v181 = vpop.permute.xlu0 %180
    %184 = vset.pattern.permute.xlu0 0
    %185 = vperm.xlu0 %184, %v75
    %v186 = vpop.permute.xlu0 %185
    %189 = vset.pattern.permute.xlu0 0
    %190 = vperm.xlu0 %189, %v76
    %v191 = vpop.permute.xlu0 %190
    %194 = vset.pattern.permute.xlu0 0
    %195 = vperm.xlu0 %194, %v77
    %v196 = vpop.permute.xlu0 %195
    %199 = vset.pattern.permute.xlu0 0
    %200 = vperm.xlu0 %199, %v78
    %v201 = vpop.permute.xlu0 %200
    %204 = vset.pattern.permute.xlu0 0
    %205 = vperm.xlu0 %204, %v79
    %v206 = vpop.permute.xlu0 %205
    %209 = vset.pattern.permute.xlu0 0
    %210 = vperm.xlu0 %209, %v80
    %v211 = vpop.permute.xlu0 %210
    %214 = vset.pattern.permute.xlu0 0
    %215 = vperm.xlu0 %214, %v81
    %v216 = vpop.permute.xlu0 %215
    %219 = vset.pattern.permute.xlu0 0
    %220 = vperm.xlu0 %219, %v82
    %v221 = vpop.permute.xlu0 %220
    %224 = vset.pattern.permute.xlu0 0
    %225 = vperm.xlu0 %224, %v83
    %v226 = vpop.permute.xlu0 %225
    %229 = vset.pattern.permute.xlu0 0
    %230 = vperm.xlu0 %229, %v84
    %v231 = vpop.permute.xlu0 %230
    %234 = vset.pattern.permute.xlu0 0
    %235 = vperm.xlu0 %234, %v85
    %v236 = vpop.permute.xlu0 %235
    %239 = vset.pattern.permute.xlu0 0
    %240 = vperm.xlu0 %239, %v86
    %v241 = vpop.permute.xlu0 %240
    %244 = vset.pattern.permute.xlu0 0
    %245 = vperm.xlu0 %244, %v87
    %v246 = vpop.permute.xlu0 %245
    %v280 = vunpack.c.l.b16 %v24
    %v281 = vunpack.c.l.b16 %v25
    %v282 = vunpack.c.l.b16 %v26
    %v283 = vunpack.c.l.b16 %v27
    %v284 = vunpack.c.l.b16 %v28
    %v285 = vunpack.c.l.b16 %v29
    %v286 = vunpack.c.l.b16 %v30
    %v287 = vunpack.c.l.b16 %v31
    %v288 = vunpack.c.l.b16 %v32
    %v289 = vunpack.c.l.b16 %v33
    %v290 = vunpack.c.l.b16 %v34
    %v291 = vunpack.c.l.b16 %v35
    %v292 = vunpack.c.l.b16 %v36
    %v293 = vunpack.c.l.b16 %v37
    %v294 = vunpack.c.l.b16 %v38
    %v295 = vunpack.c.l.b16 %v39
    %v296 = vunpack.c.l.b16 %v40
    %v297 = vunpack.c.l.b16 %v41
    %v298 = vunpack.c.l.b16 %v42
    %v299 = vunpack.c.l.b16 %v43
    %v300 = vunpack.c.l.b16 %v44
    %v301 = vunpack.c.l.b16 %v45
    %v302 = vunpack.c.l.b16 %v46
    %v303 = vunpack.c.l.b16 %v47
    %v304 = vunpack.c.l.b16 %v48
    %v305 = vunpack.c.l.b16 %v49
    %v306 = vunpack.c.l.b16 %v50
    %v307 = vunpack.c.l.b16 %v51
    %v308 = vunpack.c.l.b16 %v52
    %v309 = vunpack.c.l.b16 %v53
    %v310 = vunpack.c.l.b16 %v54
    %v311 = vunpack.c.l.b16 %v55
    %v312 = vpack.c.b16 %v281, %v280
    %v313 = vpack.c.b16 %v283, %v282
    %v314 = vpack.c.b16 %v285, %v284
    %v315 = vpack.c.b16 %v287, %v286
    %v316 = vpack.c.b16 %v289, %v288
    %v317 = vpack.c.b16 %v291, %v290
    %v318 = vpack.c.b16 %v293, %v292
    %v319 = vpack.c.b16 %v295, %v294
    %v320 = vpack.c.b16 %v297, %v296
    %v321 = vpack.c.b16 %v299, %v298
    %v322 = vpack.c.b16 %v301, %v300
    %v323 = vpack.c.b16 %v303, %v302
    %v324 = vpack.c.b16 %v305, %v304
    %v325 = vpack.c.b16 %v307, %v306
    %v326 = vpack.c.b16 %v309, %v308
    %v327 = vpack.c.b16 %v311, %v310
    %vm328 = vcmask 56320
    %v330 = vsel %vm328, %v312, 0
    %v333 = vsel %vm328, %v313, 0
    %v336 = vsel %vm328, %v314, 0
    %v339 = vsel %vm328, %v315, 0
    %v342 = vsel %vm328, %v316, 0
    %v345 = vsel %vm328, %v317, 0
    %v348 = vsel %vm328, %v318, 0
    %v351 = vsel %vm328, %v319, 0
    %v354 = vsel %vm328, %v320, 0
    %v357 = vsel %vm328, %v321, 0
    %v360 = vsel %vm328, %v322, 0
    %v363 = vsel %vm328, %v323, 0
    %v366 = vsel %vm328, %v324, 0
    %v369 = vsel %vm328, %v325, 0
    %v372 = vsel %vm328, %v326, 0
    %v375 = vsel %vm328, %v327, 0
    %vm377 = vcmask 1042432
    %vm378 = vcmask 1043456
    %v379 = vsel %vm377, 4294967295, 65535
    %v380 = vsel %vm378, %v379, 0
    %v382 = vand.u32 %v23, %v380
    %384 = vmatprep.subr.bf16.mxu0 0
    %385 = vmatpush1.bf16.msra.mxu0 0
    %386 = vmatprep.subr.bf16.mxu0 0
    %387 = vmatpush1.bf16.msra.mxu0 0
    %388 = vmatprep.subr.bf16.mxu0 0
    %389 = vmatpush1.bf16.msra.mxu0 0
    %390 = vmatprep.subr.bf16.mxu0 0
    %391 = vmatpush1.bf16.msra.mxu0 0
    %392 = vmatprep.subr.bf16.mxu0 0
    %393 = vmatpush1.bf16.msra.mxu0 0
    %394 = vmatprep.subr.bf16.mxu0 0
    %395 = vmatpush1.bf16.msra.mxu0 0
    %396 = vmatprep.subr.bf16.mxu0 0
    %397 = vmatpush1.bf16.msra.mxu0 0
    %398 = vmatprep.subr.bf16.mxu0 0
    %399 = vmatpush1.bf16.msra.mxu0 %v382
    %400 = vmatprep.subr.bf16.mxu0 0
    %401 = vmatpush2.bf16.msra.mxu0 0
    %402 = vmatprep.subr.bf16.mxu0 0
    %403 = vmatpush2.bf16.msra.mxu0 0
    %404 = vmatprep.subr.bf16.mxu0 0
    %405 = vmatpush2.bf16.msra.mxu0 0
    %406 = vmatprep.subr.bf16.mxu0 0
    %407 = vmatpush2.bf16.msra.mxu0 0
    %408 = vmatprep.subr.bf16.mxu0 0
    %409 = vmatpush2.bf16.msra.mxu0 0
    %410 = vmatprep.subr.bf16.mxu0 0
    %411 = vmatpush2.bf16.msra.mxu0 0
    %412 = vmatprep.subr.bf16.mxu0 0
    %413 = vmatpush2.bf16.msra.mxu0 0
    %414 = vmatprep.subr.bf16.mxu0 0
    %415 = vmatpush2.bf16.msra.mxu0 0
    %416 = vmatprep.mubr.bf16.mxu0 0
    %417 = vmatmul.mubr.bf16.gmra.mxu0 %v330
    %v418 = vpop.f32.mrf.mxu0
    %v419 = vadd.f32 %v91, %v418
    %v420 = vpop.f32.mrf.mxu0
    %v421 = vpop.f32.mrf.mxu0
    %v422 = vadd.f32 %v96, %v421
    %v423 = vpop.f32.mrf.mxu0
    %424 = vmatprep.mubr.bf16.mxu0 0
    %425 = vmatmul.mubr.bf16.gmra.mxu0 %v333
    %v426 = vpop.f32.mrf.mxu0
    %v427 = vadd.f32 %v101, %v426
    %v428 = vpop.f32.mrf.mxu0
    %v429 = vpop.f32.mrf.mxu0
    %v430 = vadd.f32 %v106, %v429
    %v431 = vpop.f32.mrf.mxu0
    %432 = vmatprep.mubr.bf16.mxu0 0
    %433 = vmatmul.mubr.bf16.gmra.mxu0 %v336
    %v434 = vpop.f32.mrf.mxu0
    %v435 = vadd.f32 %v111, %v434
    %v436 = vpop.f32.mrf.mxu0
    %v437 = vpop.f32.mrf.mxu0
    %v438 = vadd.f32 %v116, %v437
    %v439 = vpop.f32.mrf.mxu0
    %440 = vmatprep.mubr.bf16.mxu0 0
    %441 = vmatmul.mubr.bf16.gmra.mxu0 %v339
    %v442 = vpop.f32.mrf.mxu0
    %v443 = vadd.f32 %v121, %v442
    %v444 = vpop.f32.mrf.mxu0
    %v445 = vpop.f32.mrf.mxu0
    %v446 = vadd.f32 %v126, %v445
    %v447 = vpop.f32.mrf.mxu0
    %448 = vmatprep.mubr.bf16.mxu0 0
    %449 = vmatmul.mubr.bf16.gmra.mxu0 %v342
    %v450 = vpop.f32.mrf.mxu0
    %v451 = vadd.f32 %v131, %v450
    %v452 = vpop.f32.mrf.mxu0
    %v453 = vpop.f32.mrf.mxu0
    %v454 = vadd.f32 %v136, %v453
    %v455 = vpop.f32.mrf.mxu0
    %456 = vmatprep.mubr.bf16.mxu0 0
    %457 = vmatmul.mubr.bf16.gmra.mxu0 %v345
    %v458 = vpop.f32.mrf.mxu0
    %v459 = vadd.f32 %v141, %v458
    %v460 = vpop.f32.mrf.mxu0
    %v461 = vpop.f32.mrf.mxu0
    %v462 = vadd.f32 %v146, %v461
    %v463 = vpop.f32.mrf.mxu0
    %464 = vmatprep.mubr.bf16.mxu0 0
    %465 = vmatmul.mubr.bf16.gmra.mxu0 %v348
    %v466 = vpop.f32.mrf.mxu0
    %v467 = vadd.f32 %v151, %v466
    %v468 = vpop.f32.mrf.mxu0
    %v469 = vpop.f32.mrf.mxu0
    %v470 = vadd.f32 %v156, %v469
    %v471 = vpop.f32.mrf.mxu0
    %472 = vmatprep.mubr.bf16.mxu0 0
    %473 = vmatmul.mubr.bf16.gmra.mxu0 %v351
    %v474 = vpop.f32.mrf.mxu0
    %v475 = vadd.f32 %v161, %v474
    %v476 = vpop.f32.mrf.mxu0
    %v477 = vpop.f32.mrf.mxu0
    %v478 = vadd.f32 %v166, %v477
    %v479 = vpop.f32.mrf.mxu0
    %480 = vmatprep.mubr.bf16.mxu0 0
    %481 = vmatmul.mubr.bf16.gmra.mxu0 %v354
    %v482 = vpop.f32.mrf.mxu0
    %v483 = vadd.f32 %v171, %v482
    %v484 = vpop.f32.mrf.mxu0
    %v485 = vpop.f32.mrf.mxu0
    %v486 = vadd.f32 %v176, %v485
    %v487 = vpop.f32.mrf.mxu0
    %488 = vmatprep.mubr.bf16.mxu0 0
    %489 = vmatmul.mubr.bf16.gmra.mxu0 %v357
    %v490 = vpop.f32.mrf.mxu0
    %v491 = vadd.f32 %v181, %v490
    %v492 = vpop.f32.mrf.mxu0
    %v493 = vpop.f32.mrf.mxu0
    %v494 = vadd.f32 %v186, %v493
    %v495 = vpop.f32.mrf.mxu0
    %496 = vmatprep.mubr.bf16.mxu0 0
    %497 = vmatmul.mubr.bf16.gmra.mxu0 %v360
    %v498 = vpop.f32.mrf.mxu0
    %v499 = vadd.f32 %v191, %v498
    %v500 = vpop.f32.mrf.mxu0
    %v501 = vpop.f32.mrf.mxu0
    %v502 = vadd.f32 %v196, %v501
    %v503 = vpop.f32.mrf.mxu0
    %504 = vmatprep.mubr.bf16.mxu0 0
    %505 = vmatmul.mubr.bf16.gmra.mxu0 %v363
    %v506 = vpop.f32.mrf.mxu0
    %v507 = vadd.f32 %v201, %v506
    %v508 = vpop.f32.mrf.mxu0
    %v509 = vpop.f32.mrf.mxu0
    %v510 = vadd.f32 %v206, %v509
    %v511 = vpop.f32.mrf.mxu0
    %512 = vmatprep.mubr.bf16.mxu0 0
    %513 = vmatmul.mubr.bf16.gmra.mxu0 %v366
    %v514 = vpop.f32.mrf.mxu0
    %v515 = vadd.f32 %v211, %v514
    %v516 = vpop.f32.mrf.mxu0
    %v517 = vpop.f32.mrf.mxu0
    %v518 = vadd.f32 %v216, %v517
    %v519 = vpop.f32.mrf.mxu0
    %520 = vmatprep.mubr.bf16.mxu0 0
    %521 = vmatmul.mubr.bf16.gmra.mxu0 %v369
    %v522 = vpop.f32.mrf.mxu0
    %v523 = vadd.f32 %v221, %v522
    %v524 = vpop.f32.mrf.mxu0
    %v525 = vpop.f32.mrf.mxu0
    %v526 = vadd.f32 %v226, %v525
    %v527 = vpop.f32.mrf.mxu0
    %528 = vmatprep.mubr.bf16.mxu0 0
    %529 = vmatmul.mubr.bf16.gmra.mxu0 %v372
    %v530 = vpop.f32.mrf.mxu0
    %v531 = vadd.f32 %v231, %v530
    %v532 = vpop.f32.mrf.mxu0
    %v533 = vpop.f32.mrf.mxu0
    %v534 = vadd.f32 %v236, %v533
    %v535 = vpop.f32.mrf.mxu0
    %536 = vmatprep.mubr.bf16.mxu0 0
    %537 = vmatmul.mubr.bf16.gmra.mxu0 %v375
    %v538 = vpop.f32.mrf.mxu0
    %v539 = vadd.f32 %v241, %v538
    %v540 = vpop.f32.mrf.mxu0
    %v541 = vpop.f32.mrf.mxu0
    %v542 = vadd.f32 %v246, %v541
    %v543 = vpop.f32.mrf.mxu0
    %544 = vdwg.mxu0
    %v545 = vmax.f32 %v419, 0.0
    %v546 = vmax.f32 %v422, 0.0
    %v547 = vmax.f32 %v427, 0.0
    %v548 = vmax.f32 %v430, 0.0
    %v549 = vmax.f32 %v435, 0.0
    %v550 = vmax.f32 %v438, 0.0
    %v551 = vmax.f32 %v443, 0.0
    %v552 = vmax.f32 %v446, 0.0
    %v553 = vmax.f32 %v451, 0.0
    %v554 = vmax.f32 %v454, 0.0
    %v555 = vmax.f32 %v459, 0.0
    %v556 = vmax.f32 %v462, 0.0
    %v557 = vmax.f32 %v467, 0.0
    %v558 = vmax.f32 %v470, 0.0
    %v559 = vmax.f32 %v475, 0.0
    %v560 = vmax.f32 %v478, 0.0
    %v561 = vmax.f32 %v483, 0.0
    %v562 = vmax.f32 %v486, 0.0
    %v563 = vmax.f32 %v491, 0.0
    %v564 = vmax.f32 %v494, 0.0
    %v565 = vmax.f32 %v499, 0.0
    %v566 = vmax.f32 %v502, 0.0
    %v567 = vmax.f32 %v507, 0.0
    %v568 = vmax.f32 %v510, 0.0
    %v569 = vmax.f32 %v515, 0.0
    %v570 = vmax.f32 %v518, 0.0
    %v571 = vmax.f32 %v523, 0.0
    %v572 = vmax.f32 %v526, 0.0
    %v573 = vmax.f32 %v531, 0.0
    %v574 = vmax.f32 %v534, 0.0
    %v575 = vmax.f32 %v539, 0.0
    %v576 = vmax.f32 %v542, 0.0
    %v577 = vld [vmem:[%s3] sm:$0xff]
    %v578 = vld [vmem:[%s3 + $0x8] sm:$0xff]
    %v579 = vld [vmem:[%s3 + $0x10] sm:$0xff]
    %v580 = vld [vmem:[%s3 + $0x18] sm:$0xff]
    %v581 = vpack.c.bf16 %v546, %v545
    %v582 = vpack.c.bf16 %v548, %v547
    %v583 = vpack.c.bf16 %v550, %v549
    %v584 = vpack.c.bf16 %v552, %v551
    %v585 = vpack.c.bf16 %v554, %v553
    %v586 = vpack.c.bf16 %v556, %v555
    %v587 = vpack.c.bf16 %v558, %v557
    %v588 = vpack.c.bf16 %v560, %v559
    %v589 = vpack.c.bf16 %v562, %v561
    %v590 = vpack.c.bf16 %v564, %v563
    %v591 = vpack.c.bf16 %v566, %v565
    %v592 = vpack.c.bf16 %v568, %v567
    %v593 = vpack.c.bf16 %v570, %v569
    %v594 = vpack.c.bf16 %v572, %v571
    %v595 = vpack.c.bf16 %v574, %v573
    %v596 = vpack.c.bf16 %v576, %v575
    %v597 = vld [vmem:[%s4] sm:$0xff]
    %v598 = vld [vmem:[%s4 + $0x8] sm:$0xff]
    %v599 = vld [vmem:[%s4 + $0x10] sm:$0xff]
    %v600 = vld [vmem:[%s4 + $0x18] sm:$0xff]
    %602 = vset.pattern.permute.xlu0 0
    %603 = vperm.xlu0 %602, %v597
    %v604 = vpop.permute.xlu0 %603
    %607 = vset.pattern.permute.xlu0 0
    %608 = vperm.xlu0 %607, %v598
    %v609 = vpop.permute.xlu0 %608
    %612 = vset.pattern.permute.xlu0 0
    %613 = vperm.xlu0 %612, %v599
    %v614 = vpop.permute.xlu0 %613
    %617 = vset.pattern.permute.xlu0 0
    %618 = vperm.xlu0 %617, %v600
    %v619 = vpop.permute.xlu0 %618
    %v625 = vunpack.c.l.b16 %v577
    %v626 = vunpack.c.h.b16 %v577
    %v627 = vunpack.c.l.b16 %v578
    %v628 = vunpack.c.h.b16 %v578
    %v629 = vunpack.c.l.b16 %v579
    %v630 = vunpack.c.h.b16 %v579
    %v631 = vunpack.c.l.b16 %v580
    %v632 = vunpack.c.h.b16 %v580
    %v633 = vpack.c.b16 %v627, %v625
    %v634 = vpack.c.b16 %v628, %v626
    %v635 = vpack.c.b16 %v631, %v629
    %v636 = vpack.c.b16 %v632, %v630
    %641 = vmatprep.subr.bf16.mxu0 0
    %642 = vmatpush1.bf16.msra.mxu0 %v588
    %643 = vmatprep.subr.bf16.mxu0 0
    %644 = vmatpush1.bf16.msra.mxu0 %v587
    %645 = vmatprep.subr.bf16.mxu0 0
    %646 = vmatpush1.bf16.msra.mxu0 %v586
    %647 = vmatprep.subr.bf16.mxu0 0
    %648 = vmatpush1.bf16.msra.mxu0 %v585
    %649 = vmatprep.subr.bf16.mxu0 0
    %650 = vmatpush1.bf16.msra.mxu0 %v584
    %651 = vmatprep.subr.bf16.mxu0 0
    %652 = vmatpush1.bf16.msra.mxu0 %v583
    %653 = vmatprep.subr.bf16.mxu0 0
    %654 = vmatpush1.bf16.msra.mxu0 %v582
    %655 = vmatprep.subr.bf16.mxu0 0
    %656 = vmatpush1.bf16.msra.mxu0 %v581
    %657 = vmatprep.subr.bf16.mxu0 0
    %658 = vmatpush2.bf16.msra.mxu0 %v596
    %659 = vmatprep.subr.bf16.mxu0 0
    %660 = vmatpush2.bf16.msra.mxu0 %v595
    %661 = vmatprep.subr.bf16.mxu0 0
    %662 = vmatpush2.bf16.msra.mxu0 %v594
    %663 = vmatprep.subr.bf16.mxu0 0
    %664 = vmatpush2.bf16.msra.mxu0 %v593
    %665 = vmatprep.subr.bf16.mxu0 0
    %666 = vmatpush2.bf16.msra.mxu0 %v592
    %667 = vmatprep.subr.bf16.mxu0 0
    %668 = vmatpush2.bf16.msra.mxu0 %v591
    %669 = vmatprep.subr.bf16.mxu0 0
    %670 = vmatpush2.bf16.msra.mxu0 %v590
    %671 = vmatprep.subr.bf16.mxu0 0
    %672 = vmatpush2.bf16.msra.mxu0 %v589
    %673 = vmatprep.mubr.bf16.mxu0 %v634
    %674 = vmatmul.mubr.bf16.gmra.mxu0 %v633
    %v675 = vpop.f32.mrf.mxu0
    %v676 = vadd.f32 %v604, %v675
    %v677 = vpop.f32.mrf.mxu0
    %v678 = vpop.f32.mrf.mxu0
    %v679 = vadd.f32 %v609, %v678
    %v680 = vpop.f32.mrf.mxu0
    %681 = vmatprep.mubr.bf16.mxu0 %v636
    %682 = vmatmul.mubr.bf16.gmra.mxu0 %v635
    %v683 = vpop.f32.mrf.mxu0
    %v684 = vadd.f32 %v614, %v683
    %v685 = vpop.f32.mrf.mxu0
    %v686 = vpop.f32.mrf.mxu0
    %v687 = vadd.f32 %v619, %v686
    %v688 = vpop.f32.mrf.mxu0
    %689 = vdwg.mxu0
    %690 = vst [vmem:[#allocation2] sm:$0xff] %v676
    %691 = vst [vmem:[#allocation2 + $0x8] sm:$0xff] %v679
    %692 = vst [vmem:[#allocation2 + $0x10] sm:$0xff] %v684
    %693 = vst [vmem:[#allocation2 + $0x18] sm:$0xff] %v687
    // Predicated region
    $region22: #{tpu_custom_call.1} parent=1 // pred_check
      _
    $region23: #{tpu_custom_call.1} parent=1 // pred_check_branch
      %695 = sbr.rel (0) target = $region25
    $region24: #{tpu_custom_call.1} parent=1 // pred_region
      %s697 = ssub.s32 512, 512
      %698 = vsyncadd [#allocation3], %s697
      %s699 = sshll.u32 [#allocation2], 4
      %s700 = int_to_ptr.vmem [resolvable:$true] %s699
      %705 = dma.vmem_to_hbm [thread:$0]  %s700, 512, %s5, [#allocation3], 128, 128, 8
    $region25: #{tpu_custom_call.1} parent=1 // pred_fallthru
      _
    // Predicated region
    $region26: #{tpu_custom_call.1} parent=1 // pred_check
      _
    $region27: #{tpu_custom_call.1} parent=1 // pred_check_branch
      %707 = sbr.rel (0) target = $region29
    $region28: #{tpu_custom_call.1} parent=1 // pred_region
      %708 = dma.done [#allocation3], 512
    $region29: #{tpu_custom_call.1} parent=1 // pred_fallthru
      _
    %709 = vsyncpa [#allocation3], 1

</llo_original>
